<compile_context>
chip_gen: v7x
topology: tpu7x:2x2x1
jax: 0.10.0
libtpu: 0.0.40
codegen_flags: <defaults>
</compile_context>

<pallas_src>
import jax
import jax.numpy as jnp
from jax.experimental import pallas as pl
from jax.experimental.pallas import tpu as pltpu


def _locked_dropout_kernel(mask_ref, x_ref, o_ref):
    # mask_ref: (1, tile_bd) pre-materialized {0, 1/(0.1-p)} in the input dtype.
    # x_ref / o_ref: (tile_t, tile_bd) stream tiles. One broadcast multiply per tile.
    o_ref[...] = x_ref[...] * mask_ref[...]


def _round_up(x, m):
    return ((x + m - 1) // m) * m


def _cdiv(a, b):
    return (a + b - 1) // b


def _vmem_capacity_bytes():
    try:
        return int(getattr(pltpu.get_tpu_info(), "vmem_capacity_bytes"))
    except Exception:
        return 128 << 20  # v5e/v6e default if the query is unavailable


def locked_dropout(inputs, key, dropout=0.5, training=True, inplace=False):
    """Pallas implementation of LockedDropout.forward.

    inputs:   (seq_len, batch, in_dim)
    key:      jax PRNG key (determinism stand-in for torch's global RNG)
    dropout:  probability that a mask element is 1 (reproduces the module as written)
    inplace:  alias the (reshaped) input buffer as the output (caller must donate it)
    """
    if (not training) or (dropout is None) or (dropout == 0.0):
        return inputs

    T, B, D = inputs.shape
    BD = B * D
    dtype = inputs.dtype
    itemsize = jnp.dtype(dtype).itemsize

    # ---- Locked mask, hoisted out of the hot loop ------------------------------
    # Integer-threshold Bernoulli: P(keep) == dropout (module quirk, on purpose).
    thresh = min(int(round(float(dropout) * (1 << 32))), (1 << 32) - 1)
    scale = 1.0 / (0.1 - float(dropout))  # reproduces the module's (buggy) scaling
    keep = jax.random.bits(key, (1, BD), dtype=jnp.uint32) < jnp.uint32(thresh)
    mask = jnp.where(keep, jnp.asarray(scale, dtype), jnp.asarray(0.0, dtype))

    # ---- Lane-dense 2D layout; pad last dim to a multiple of 128 ---------------
    x2 = inputs.reshape(T, BD)
    BDp = _round_up(BD, 128)
    if BDp != BD:
        x2 = jnp.pad(x2, ((0, 0), (0, BDp - BD)))
        mask = jnp.pad(mask, ((0, 0), (0, BDp - BD)))

    # ---- Generation-aware tiling ------------------------------------------------
    cap = _vmem_capacity_bytes()
    vmem_limit = int(min((cap * 3) // 4, 96 << 20))        # 48 MiB on v7x, 96 MiB else
    budget = (32 << 20) if cap >= (128 << 20) else (20 << 20)
    tile_budget = budget // 4                               # per buffer: 2x in + 2x out

    # dtype-aware sublane alignment: f32 -> 8, bf16/f16 -> 16, int8/fp8 -> 32.
    sub_align = max(8, 32 // itemsize)

    # tile_bd: full width unless that would force fewer than ~64 rows per tile.
    min_rows = min(_round_up(T, sub_align), 64)
    if BDp * itemsize * min_rows > tile_budget:
        tile_bd = (tile_budget // (min_rows * itemsize) // 128) * 128
        tile_bd = int(min(max(tile_bd, 128), BDp))
    else:
        tile_bd = BDp

    # tile_t: as many rows as fit in the per-tile budget, sublane-aligned.
    rows = tile_budget // (tile_bd * itemsize)
    if rows >= T:
        tile_t = T
    else:
        tile_t = int(max(sub_align, (rows // sub_align) * sub_align))

    # v7x-class chips (64 MiB VMEM, 2 TensorCores): ensure >= 2 parallel grid steps
    # so the second core is not idle when T fits in a single tile.
    if cap < (100 << 20) and _cdiv(T, tile_t) * _cdiv(BDp, tile_bd) < 2 and BDp >= 256:
        tile_bd = _round_up(BDp // 2, 128)

    grid = (_cdiv(T, tile_t), _cdiv(BDp, tile_bd))

    out2 = pl.pallas_call(
        _locked_dropout_kernel,
        out_shape=jax.ShapeDtypeStruct((T, BDp), dtype),
        grid=grid,
        in_specs=[
            pl.BlockSpec((1, tile_bd), lambda i, j: (0, j)),        # locked mask slab
            pl.BlockSpec((tile_t, tile_bd), lambda i, j: (i, j)),   # input stream tile
        ],
        out_specs=pl.BlockSpec((tile_t, tile_bd), lambda i, j: (i, j)),
        compiler_params=pltpu.CompilerParams(
            dimension_semantics=("parallel", "parallel"),           # megacore split
            vmem_limit_bytes=vmem_limit,
        ),
        input_output_aliases=({1: 0} if inplace else {}),
    )(mask, x2)

    if BDp != BD:
        out2 = out2[:, :BD]
    return out2.reshape(T, B, D)


if __name__ == "__main__":
    # Shapes implied by the forward: (seq_len, batch, in_dim).
    seq_len, batch, in_dim = 8, 2, 32
    root = jax.random.PRNGKey(0)
    k_x, k_mask = jax.random.split(root)
    x = jax.random.normal(k_x, (seq_len, batch, in_dim), dtype=jnp.float32)

    out = locked_dropout(x, k_mask, dropout=0.5, training=True)
    out = jax.block_until_ready(out)
    assert out.shape == x.shape

    # Sanity: each (b, d) column is uniformly 0 or uniformly x * (1/(0.1-0.5)) = -2.5*x
    # across the whole seq axis ("locked" mask semantics).
    ratio = out / jnp.where(x == 0, 1.0, x)
    col_ok = jnp.all(
        jnp.logical_or(
            jnp.all(jnp.isclose(ratio, 0.0, atol=1e-5), axis=0),
            jnp.all(jnp.isclose(ratio, -2.5, atol=1e-4), axis=0),
        )
    )
    assert bool(col_ok), "locked-dropout mask semantics violated"

    # Eval-mode / dropout=0 passthrough.
    out_eval = locked_dropout(x, k_mask, dropout=0.5, training=False)
    assert bool(jnp.all(out_eval == x))
    out_zero = locked_dropout(x, k_mask, dropout=0.0, training=True)
    assert bool(jnp.all(out_zero == x))

    print("KERNEL_OK")
</pallas_src>

<mosaic_0001>
module attributes {stable_mosaic.version = 11 : i64} {
  func.func @_locked_dropout_kernel(%arg0: i32, %arg1: i32, %arg2: memref<1x128xf32, #tpu.memory_space<vmem>>, %arg3: memref<8x128xf32, #tpu.memory_space<vmem>>, %arg4: memref<8x128xf32, #tpu.memory_space<vmem>>) attributes {dimension_semantics = [#tpu.dimension_semantics<parallel>, #tpu.dimension_semantics<parallel>], iteration_bounds = array<i64: 1, 1>, scalar_prefetch = 0 : i64, scratch_operands = 0 : i64, tpu.core_type = #tpu.core_type<tc>, window_params = [{transform_indices = @transform_0, window_bounds = array<i64: 1, 128>}, {transform_indices = @transform_1, window_bounds = array<i64: 8, 128>}, {transform_indices = @transform_2, window_bounds = array<i64: 8, 128>}]} {
    %c0 = arith.constant 0 : index
    %c0_0 = arith.constant 0 : index
    %0 = vector.load %arg3[%c0, %c0_0] : memref<8x128xf32, #tpu.memory_space<vmem>>, vector<8x128xf32>
    %c0_1 = arith.constant 0 : index
    %c0_2 = arith.constant 0 : index
    %1 = vector.load %arg2[%c0_1, %c0_2] : memref<1x128xf32, #tpu.memory_space<vmem>>, vector<1x128xf32>
    %2 = vector.broadcast %1 : vector<1x128xf32> to vector<8x128xf32>
    %3 = arith.mulf %0, %2 : vector<8x128xf32>
    %c0_3 = arith.constant 0 : index
    %c0_4 = arith.constant 0 : index
    %4 = vector.load %arg4[%c0_3, %c0_4] : memref<8x128xf32, #tpu.memory_space<vmem>>, vector<8x128xf32>
    tpu.vector_store %arg4[%c0_3, %c0_4], %3 {strides = array<i32>} : memref<8x128xf32, #tpu.memory_space<vmem>>, vector<8x128xf32>,
    return
  }
  func.func @transform_0(%arg0: i32, %arg1: i32) -> (i32, i32) {
    %c0_i32 = arith.constant 0 : i32
    %c0_i32_0 = arith.constant 0 : i32
    return %c0_i32, %arg1 : i32, i32
  }
  func.func @transform_1(%arg0: i32, %arg1: i32) -> (i32, i32) {
    %c0_i32 = arith.constant 0 : i32
    return %arg0, %arg1 : i32, i32
  }
  func.func @transform_2(%arg0: i32, %arg1: i32) -> (i32, i32) {
    %c0_i32 = arith.constant 0 : i32
    return %arg0, %arg1 : i32, i32
  }
}

</mosaic_0001>

<llo_original>
// kernel: tpu_custom_call.1
$region0: #{tpu_custom_call.1}
  #allocation0 [shape = 'u32[]', space=smem, size = 0x4, offset = 0x4, fixed_abs, tag = 'smem constant byte address 0x4 - core index']
  #allocation1 [shape = 'u32[144,128]{1,0:T(1,128)}', space=vmem, size = 0x12000, scoped, tag = 'internal scratch']
  %s0 = inlined_call_operand.hbm [shape: f32[1,128], index: 0, kind: input, shape index: {}]
  %s1 = inlined_call_operand.hbm [shape: f32[8,128], index: 1, kind: input, shape index: {}]
  %s2 = inlined_call_operand.hbm [shape: f32[8,128], index: 2, kind: output, shape index: {}]
  %s3 = sld [smem:[#allocation0]]
  $region26: #{tpu_custom_call.1} parent=0
    _
  %s5 = ssub.s32 1, %s3
  %s6 = scalar_select 0, %s5, %s3
  $region1: #{tpu_custom_call.1} parent=0
    #allocation2 [shape = 'u8[512]{0}', space=vmem, size = 0x400, scoped, tag = 'input window, operand 0, single buffered']
    #allocation3 [shape = 's32[1]{0}', space=sflag, size = 0x4, scoped, tag = 'scoped memory for tpu_custom_call.1']
    #allocation4 [shape = 's32[1]{0}', space=sflag, size = 0x4, scoped, tag = 'scoped memory for tpu_custom_call.1']
    #allocation5 [shape = 'u8[4096]{0}', space=vmem, size = 0x1000, scoped, tag = 'input window, operand 1, single buffered']
    #allocation6 [shape = 's32[1]{0}', space=sflag, size = 0x4, scoped, tag = 'scoped memory for tpu_custom_call.1']
    #allocation7 [shape = 'u8[4096]{0}', space=vmem, size = 0x1000, scoped, tag = 'output window, operand 0, single buffered']
    %7 = vsyncpa [#allocation3], 0
    %8 = vsyncpa [#allocation6], 0
    %9 = vsyncpa [#allocation4], 0
    // Predicated region
    $region2: #{tpu_custom_call.1} parent=1 // pred_check
      _
    $region3: #{tpu_custom_call.1} parent=1 // pred_check_branch
      %11 = sbr.rel (0) target = $region5
    $region4: #{tpu_custom_call.1} parent=1 // pred_region
      %s13 = ssub.s32 16, 16
      %14 = vsyncadd [#allocation3], %s13
      %s16 = sshll.u32 [#allocation2], 4
      %s17 = int_to_ptr.vmem [resolvable:$true] %s16
      %19 = dma.hbm_to_vmem [thread:$0]  %s0, 16, %s17, [#allocation3]
    $region5: #{tpu_custom_call.1} parent=1 // pred_fallthru
      _
    // Predicated region
    $region6: #{tpu_custom_call.1} parent=1 // pred_check
      _
    $region7: #{tpu_custom_call.1} parent=1 // pred_check_branch
      %21 = sbr.rel (0) target = $region9
    $region8: #{tpu_custom_call.1} parent=1 // pred_region
      %s23 = ssub.s32 128, 128
      %24 = vsyncadd [#allocation6], %s23
      %s26 = sshll.u32 [#allocation5], 4
      %s27 = int_to_ptr.vmem [resolvable:$true] %s26
      %29 = dma.hbm_to_vmem [thread:$0]  %s1, 128, %s27, [#allocation6]
    $region9: #{tpu_custom_call.1} parent=1 // pred_fallthru
      _
    // Predicated region
    $region10: #{tpu_custom_call.1} parent=1 // pred_check
      _
    $region11: #{tpu_custom_call.1} parent=1 // pred_check_branch
      %31 = sbr.rel (0) target = $region13
    $region12: #{tpu_custom_call.1} parent=1 // pred_region
      %32 = dma.done [#allocation3], 16
    $region13: #{tpu_custom_call.1} parent=1 // pred_fallthru
      _
    // Predicated region
    $region14: #{tpu_custom_call.1} parent=1 // pred_check
      _
    $region15: #{tpu_custom_call.1} parent=1 // pred_check_branch
      %34 = sbr.rel (0) target = $region17
    $region16: #{tpu_custom_call.1} parent=1 // pred_region
      %35 = dma.done [#allocation6], 128
    $region17: #{tpu_custom_call.1} parent=1 // pred_fallthru
      _
    %v36 = vld [vmem:[#allocation5] sm:$0xff]
    %v37 = vld [vmem:[#allocation2] sm:$0x1]
    %v39 = vlaneseq
    %v40 = vshrl.u32 %v39, 7
    %v41 = vsub.s32 0, %v40
    %v42 = vrot.slane %v37, %v41
    %v44 = vmul.f32 %v36, %v42
    %45 = vst [vmem:[#allocation7] sm:$0xff] %v44
    // Predicated region
    $region18: #{tpu_custom_call.1} parent=1 // pred_check
      _
    $region19: #{tpu_custom_call.1} parent=1 // pred_check_branch
      %47 = sbr.rel (0) target = $region21
    $region20: #{tpu_custom_call.1} parent=1 // pred_region
      %s49 = ssub.s32 128, 128
      %50 = vsyncadd [#allocation4], %s49
      %s52 = sshll.u32 [#allocation7], 4
      %s53 = int_to_ptr.vmem [resolvable:$true] %s52
      %55 = dma.vmem_to_hbm [thread:$0]  %s53, 128, %s2, [#allocation4]
    $region21: #{tpu_custom_call.1} parent=1 // pred_fallthru
      _
    // Predicated region
    $region22: #{tpu_custom_call.1} parent=1 // pred_check
      _
    $region23: #{tpu_custom_call.1} parent=1 // pred_check_branch
      %57 = sbr.rel (0) target = $region25
    $region24: #{tpu_custom_call.1} parent=1 // pred_region
      %58 = dma.done [#allocation4], 128
    $region25: #{tpu_custom_call.1} parent=1 // pred_fallthru
      _
    %59 = vsyncpa [#allocation3], 1
    %60 = vsyncpa [#allocation6], 1
    %61 = vsyncpa [#allocation4], 1

</llo_original>
